<compile_context>
chip_gen: v7x
topology: tpu7x:2x2x1
jax: 0.10.0
libtpu: 0.0.40
codegen_flags: <defaults>
</compile_context>

<pallas_src>
import jax
import jax.numpy as jnp
from jax.experimental import pallas as pl
from jax.experimental.pallas import tpu as pltpu


# Single-buffer the constant-index RHS only once the saved pipeline copy is
# material (frees VMEM where it matters, esp. v7x; tiny RHS gains nothing).
_SINGLE_BUFFER_RHS_BYTES = 2 * 1024 * 1024


# ----------------------------------------------------------------------------
# Generation-aware VMEM budgets
# ----------------------------------------------------------------------------
def _vmem_budgets():
    """(scoped vmem_limit_bytes, working-set budget) for the current chip."""
    cap = 64 * 1024 * 1024                       # conservative (v7x-sized) fallback
    try:
        cap = int(pltpu.get_tpu_info().vmem_capacity_bytes)
    except Exception:                            # non-TPU / older jax: keep fallback
        pass
    # ~96 MiB on 128-MiB chips (v5e/v6e), ~48 MiB on v7x (64 MiB per TC).
    limit = min((cap * 3) // 4, 96 * 1024 * 1024)
    budget = limit - 4 * 1024 * 1024             # headroom for compiler scratch
    return limit, budget


# ----------------------------------------------------------------------------
# Kernel
# ----------------------------------------------------------------------------
def _ip_sigmoid_kernel(a_ref, b_ref, o_ref):
    # (tm, D) x (tn_or_Np, D)^T contraction over the latent dim on the MXU,
    # accumulated in f32.
    s = jax.lax.dot_general(
        a_ref[...], b_ref[...],
        dimension_numbers=(((1,), (1,)), ((), ())),
        preferred_element_type=jnp.float32)
    # sigmoid(x) == 0.5 * (tanh(x/2) + 1): one EUP transcendental per element,
    # no exp + full-precision divide.  Epilogue stays in f32 then casts.
    o_ref[...] = (0.5 * (jnp.tanh(0.5 * s) + 1.0)).astype(o_ref.dtype)


# ----------------------------------------------------------------------------
# Helpers
# ----------------------------------------------------------------------------
def dropout_bits(key, shape):
    """uint32 random bits backing the dropout keep-mask (shared with tests)."""
    return jax.random.bits(key, shape, dtype=jnp.uint32)


def _pick_path_b_tiles(D, it, ot, budget):
    """Largest lane-dense (tm, tn) whose double-buffered working set fits."""
    for tn in (2048, 1024, 512, 256, 128):
        for tm in (512, 256, 128):
            if 2 * (tm + tn) * D * it + 2 * tm * tn * ot <= budget:
                return tm, tn
    return 128, 128


# ----------------------------------------------------------------------------
# Wrapper: InnerProductDecoder.forward
# ----------------------------------------------------------------------------
def inner_product_decoder(z, *, dropout=0.0, training=False, rng_key=None,
                          matmul_dtype=None, out_dtype=None):
    """Pallas implementation of InnerProductDecoder.forward.

    matmul_dtype: optionally cast the MXU operands (e.g. jnp.bfloat16 on
      v6e/v7x for the bf16-native MXU and halved z DMA bytes); accumulation
      and the sigmoid epilogue stay float32.  Default keeps f32 numerics.
    out_dtype: optionally emit the adjacency in a narrower dtype (e.g. bf16
      halves the dominant N^2 HBM write).  Default matches z.dtype (torch
      semantics).
    """
    N, D = z.shape
    out_dtype = z.dtype if out_dtype is None else jnp.dtype(out_dtype)

    # ---- dropout (training only): plain JAX select, fused by XLA ------------
    if training and dropout > 0.0:
        if dropout >= 1.0:
            z = jnp.zeros_like(z)
        else:
            if rng_key is None:
                rng_key = jax.random.PRNGKey(0)
            bits = dropout_bits(rng_key, (N, D))
            threshold = min(int(dropout * 4294967296.0), 4294967295)
            keep = bits >= jnp.uint32(threshold)
            z = jnp.where(keep, z * (1.0 / (1.0 - dropout)),
                          jnp.zeros_like(z)).astype(z.dtype)

    if matmul_dtype is not None:
        z = z.astype(matmul_dtype)

    it = jnp.dtype(z.dtype).itemsize
    ot = jnp.dtype(out_dtype).itemsize
    vmem_limit, budget = _vmem_budgets()

    # 128-granular padding: only the row-tile divisibility and the lane-dense
    # output width require it; anything beyond 128 is wasted compute and a
    # bigger trailing slice copy.
    n128 = pl.cdiv(N, 128) * 128
    rhs_bytes = n128 * D * it
    rhs_bufs = 1 if rhs_bytes >= _SINGLE_BUFFER_RHS_BYTES else 2

    # ---- Path A: RHS z fully resident in VMEM (single fetch) ----------------
    # Pick the largest row tile (multiple of 128 dividing n128) whose working
    # set fits the budget while keeping >= 2 grid steps so both v7x
    # TensorCores get work.  On v7x the smaller budget shrinks tm
    # (512 -> 256 -> 128) before the resident-RHS path is abandoned.
    min_steps = 2 if n128 >= 256 else 1
    tm_a = None
    for cand in (512, 256, 128):
        if n128 % cand or (n128 // cand) < min_steps:
            continue
        ws = 2 * cand * D * it + rhs_bufs * rhs_bytes + 2 * cand * n128 * ot
        if ws <= budget:
            tm_a = cand
            break

    if tm_a is not None:
        Np = n128
        zp = z if Np == N else jnp.pad(z, ((0, Np - N), (0, 0)))
        if rhs_bufs == 1:
            # Constant-index RHS gains nothing from double buffering.
            rhs_spec = pl.BlockSpec((Np, D), lambda i: (0, 0),
                                    pipeline_mode=pl.Buffered(1))
        else:
            rhs_spec = pl.BlockSpec((Np, D), lambda i: (0, 0))
        adj_p = pl.pallas_call(
            _ip_sigmoid_kernel,
            out_shape=jax.ShapeDtypeStruct((Np, Np), out_dtype),
            grid_spec=pl.GridSpec(
                grid=(Np // tm_a,),
                in_specs=[pl.BlockSpec((tm_a, D), lambda i: (i, 0)),
                          rhs_spec],
                out_specs=pl.BlockSpec((tm_a, Np), lambda i: (i, 0)),
            ),
            compiler_params=pltpu.CompilerParams(
                dimension_semantics=("parallel",),
                vmem_limit_bytes=vmem_limit),
        )(zp, zp)
    else:
        # ---- Path B: 2-D tiling for very large N ----------------------------
        # Wide, lane-dense output tiles (kernel is HBM-write-bound); the
        # column axis is innermost so the (tm, D) LHS block is not re-DMA'd.
        tm_b, tn_b = _pick_path_b_tiles(D, it, ot, budget)
        Np = pl.cdiv(N, max(tm_b, tn_b)) * max(tm_b, tn_b)
        zp = z if Np == N else jnp.pad(z, ((0, Np - N), (0, 0)))
        adj_p = pl.pallas_call(
            _ip_sigmoid_kernel,
            out_shape=jax.ShapeDtypeStruct((Np, Np), out_dtype),
            grid_spec=pl.GridSpec(
                grid=(Np // tm_b, Np // tn_b),
                in_specs=[pl.BlockSpec((tm_b, D), lambda i, j: (i, 0)),
                          pl.BlockSpec((tn_b, D), lambda i, j: (j, 0))],
                out_specs=pl.BlockSpec((tm_b, tn_b), lambda i, j: (i, j)),
            ),
            compiler_params=pltpu.CompilerParams(
                dimension_semantics=("parallel", "parallel"),
                vmem_limit_bytes=vmem_limit),
        )(zp, zp)

    return adj_p if Np == N else adj_p[:N, :N]


# ----------------------------------------------------------------------------
# Self-test
# ----------------------------------------------------------------------------
if __name__ == "__main__":
    key = jax.random.PRNGKey(0)
    N, D = 256, 64
    z = jax.random.normal(key, (N, D), dtype=jnp.float32)

    # Eval-mode forward (dropout is identity, like module.eval()).
    adj = jax.block_until_ready(
        inner_product_decoder(z, dropout=0.5, training=False))
    ref = jax.nn.sigmoid(jnp.dot(z, z.T, precision=jax.lax.Precision.HIGHEST))
    assert adj.shape == (N, N) and adj.dtype == z.dtype
    assert jnp.allclose(adj, ref, atol=2e-3, rtol=2e-3)

    # Training-mode forward: rebuild the same keep-mask from the same key to
    # form a pure-JAX reference.
    dkey = jax.random.PRNGKey(1)
    adj_t = jax.block_until_ready(
        inner_product_decoder(z, dropout=0.5, training=True, rng_key=dkey))
    bits = dropout_bits(dkey, (N, D))
    keep = bits >= jnp.uint32(min(int(0.5 * 4294967296.0), 4294967295))
    zd = jnp.where(keep, z * 2.0, 0.0)
    ref_t = jax.nn.sigmoid(
        jnp.dot(zd, zd.T, precision=jax.lax.Precision.HIGHEST))
    assert adj_t.shape == (N, N)
    assert jnp.allclose(adj_t, ref_t, atol=2e-3, rtol=2e-3)

    # Non-multiple-of-128 N exercises the (128-granular) padding + slice path.
    z2 = jax.random.normal(jax.random.PRNGKey(2), (200, 32), dtype=jnp.float32)
    adj2 = jax.block_until_ready(inner_product_decoder(z2))
    ref2 = jax.nn.sigmoid(
        jnp.dot(z2, z2.T, precision=jax.lax.Precision.HIGHEST))
    assert adj2.shape == (200, 200)
    assert jnp.allclose(adj2, ref2, atol=2e-3, rtol=2e-3)

    print("KERNEL_OK")
</pallas_src>

<mosaic_0001>
module attributes {stable_mosaic.version = 11 : i64} {
  func.func @_ip_sigmoid_kernel(%arg0: i32, %arg1: memref<128x64xf32, #tpu.memory_space<vmem>>, %arg2: memref<256x64xf32, #tpu.memory_space<vmem>>, %arg3: memref<128x256xf32, #tpu.memory_space<vmem>>) attributes {dimension_semantics = [#tpu.dimension_semantics<parallel>], iteration_bounds = array<i64: 2>, scalar_prefetch = 0 : i64, scratch_operands = 0 : i64, tpu.core_type = #tpu.core_type<tc>, window_params = [{transform_indices = @transform_0, window_bounds = array<i64: 128, 64>}, {pipeline_mode = #tpu.pipeline_mode<synchronous>, transform_indices = @transform_1, window_bounds = array<i64: 256, 64>}, {transform_indices = @transform_2, window_bounds = array<i64: 128, 256>}]} {
    %c0 = arith.constant 0 : index
    %c0_0 = arith.constant 0 : index
    %0 = vector.load %arg1[%c0, %c0_0] : memref<128x64xf32, #tpu.memory_space<vmem>>, vector<128x64xf32>
    %c0_1 = arith.constant 0 : index
    %c0_2 = arith.constant 0 : index
    %1 = vector.load %arg2[%c0_1, %c0_2] : memref<256x64xf32, #tpu.memory_space<vmem>>, vector<256x64xf32>
    %cst = arith.constant dense<0.000000e+00> : vector<128x256xf32>
    %2 = tpu.matmul %0, %1, %cst {dimension_numbers = #tpu.dot_dimension_numbers<[1], [1], [0], [0], [0, 0, 1, 0], [], []>} : vector<128x64xf32>, vector<256x64xf32>, vector<128x256xf32> -> vector<128x256xf32>
    %cst_3 = arith.constant 5.000000e-01 : f32
    %3 = vector.broadcast %cst_3 : f32 to vector<128x256xf32>
    %4 = arith.mulf %3, %2 : vector<128x256xf32>
    %5 = math.tanh %4 : vector<128x256xf32>
    %cst_4 = arith.constant 1.000000e+00 : f32
    %6 = vector.broadcast %cst_4 : f32 to vector<128x256xf32>
    %7 = arith.addf %5, %6 : vector<128x256xf32>
    %cst_5 = arith.constant 5.000000e-01 : f32
    %8 = vector.broadcast %cst_5 : f32 to vector<128x256xf32>
    %9 = arith.mulf %8, %7 : vector<128x256xf32>
    %c0_6 = arith.constant 0 : index
    %c0_7 = arith.constant 0 : index
    %10 = vector.load %arg3[%c0_6, %c0_7] : memref<128x256xf32, #tpu.memory_space<vmem>>, vector<128x256xf32>
    tpu.vector_store %arg3[%c0_6, %c0_7], %9 {strides = array<i32>} : memref<128x256xf32, #tpu.memory_space<vmem>>, vector<128x256xf32>,
    return
  }
  func.func @transform_0(%arg0: i32) -> (i32, i32) {
    %c0_i32 = arith.constant 0 : i32
    %c0_i32_0 = arith.constant 0 : i32
    return %arg0, %c0_i32 : i32, i32
  }
  func.func @transform_1(%arg0: i32) -> (i32, i32) {
    %c0_i32 = arith.constant 0 : i32
    %c0_i32_0 = arith.constant 0 : i32
    %c0_i32_1 = arith.constant 0 : i32
    return %c0_i32, %c0_i32_0 : i32, i32
  }
  func.func @transform_2(%arg0: i32) -> (i32, i32) {
    %c0_i32 = arith.constant 0 : i32
    %c0_i32_0 = arith.constant 0 : i32
    return %arg0, %c0_i32 : i32, i32
  }
}

</mosaic_0001>

<llo_original>
// kernel: tpu_custom_call.1
$region0: #{tpu_custom_call.1}
  #allocation0 [shape = 'u32[]', space=smem, size = 0x4, offset = 0x4, fixed_abs, tag = 'smem constant byte address 0x4 - core index']
  #allocation1 [shape = 'u32[144,128]{1,0:T(1,128)}', space=vmem, size = 0x12000, scoped, tag = 'internal scratch']
  %s0 = inlined_call_operand.vmem [shape: f32[256,64], index: 0, kind: input, shape index: {}]
  %s1 = inlined_call_operand.vmem [shape: f32[256,64], index: 1, kind: input, shape index: {}]
  %s2 = inlined_call_operand.hbm [shape: f32[256,256], index: 2, kind: output, shape index: {}]
  %s3 = sld [smem:[#allocation0]]
  $region41: #{tpu_custom_call.1} parent=0
    _
  %s5 = ssub.s32 1, %s3
  %s6 = scalar_select 0, %s5, %s3
  $region1: #{tpu_custom_call.1} parent=0
    #allocation2 [shape = 'u8[262144]{0}', space=vmem, size = 0x40000, scoped, tag = 'output window, operand 0']
    #allocation3 [shape = 's32[2]{0}', space=sflag, size = 0x8, scoped, tag = 'scoped memory for tpu_custom_call.1']
    %7 = vsyncpa [#allocation3], 0
    %s8 = scalar_lea.sflag [#allocation3], 1
    %9 = vsyncpa %s8, 0
    loop: start=0, step=1, limit=4
    $region2: #{tpu_custom_call.1} parent=1 // loop_pre_header
      _
    $region3: #{tpu_custom_call.1} parent=1 // loop_header
      %s11 = sphi 0, %s15
      %p12 = scmp.ge.s32.totalorder %s11, 4
      %s21 = sphi 0, %s23
      %s24 = sphi 0, %s21
      %s25 = sphi 0, %s24
      %s41 = sphi 0, %s25
      %s45 = sphi 0, %s45
      %s47 = sphi 0, %s45
      %s48 = sphi 0, %s47
      %s62 = sphi 0, %s48
      %s68 = sphi 0, %s70
      %s71 = sphi 0, %s68
      %s72 = sphi 0, %s71
      %s88 = sphi 0, %s72
    $region4: #{tpu_custom_call.1} parent=1 // loop_header_branch
      %14 = sbr.rel (%p12) target = $region8
    $region5: #{tpu_custom_call.1} parent=1 // loop_body
      %s16 = ssub.s32 %s11, 1
      %s17 = ssub.s32 %s11, 2
      %s18 = sadd.s32 %s11, 1
      %s19 = ssub.s32 %s11, %s18
      %p20 = scmp.eq.s32.totalorder %s19, 0
      %s22 = sadd.s32 %s21, 1
      %s23 = scalar_select %p20, %s21, %s22
      %p26 = pneg %p20
      %p27 = scmp.eq.s32.totalorder %s11, 1
      %p28 = por %p26, %p27
      %p29 = scmp.ne.s32.totalorder %s21, %s24
      %p30 = scmp.eq.s32.totalorder %s11, 0
      %p31 = por %p29, %p30
      %p32 = scmp.ne.s32.totalorder %s21, %s24
      %p33 = scmp.eq.s32.totalorder %s16, 1
      %p34 = por %p32, %p33
      %p35 = scmp.ne.s32.totalorder %s24, %s25
      %p36 = scmp.eq.s32.totalorder %s16, 0
      %p37 = por %p35, %p36
      %p38 = scmp.ne.s32.totalorder %s24, %s25
      %p39 = scmp.eq.s32.totalorder %s17, 1
      %p40 = por %p38, %p39
      %p42 = scmp.ne.s32.totalorder %s25, %s41
      %p43 = scmp.eq.s32.totalorder %s17, 0
      %p44 = por %p42, %p43
      %s46 = sadd.s32 %s45, 1
      %p49 = scmp.eq.s32.totalorder %s11, 1
      %p50 = scmp.ne.s32.totalorder %s45, %s47
      %p51 = scmp.eq.s32.totalorder %s11, 0
      %p52 = por %p50, %p51
      %p53 = scmp.ne.s32.totalorder %s45, %s47
      %p54 = scmp.eq.s32.totalorder %s16, 1
      %p55 = por %p53, %p54
      %p56 = scmp.ne.s32.totalorder %s47, %s48
      %p57 = scmp.eq.s32.totalorder %s16, 0
      %p58 = por %p56, %p57
      %p59 = scmp.ne.s32.totalorder %s47, %s48
      %p60 = scmp.eq.s32.totalorder %s17, 1
      %p61 = por %p59, %p60
      %p63 = scmp.ne.s32.totalorder %s48, %s62
      %p64 = scmp.eq.s32.totalorder %s17, 0
      %p65 = por %p63, %p64
      %s66 = ssub.s32 %s11, %s18
      %p67 = scmp.eq.s32.totalorder %s66, 0
      %s69 = sadd.s32 %s68, 1
      %s70 = scalar_select %p67, %s68, %s69
      %p73 = pneg %p67
      %p74 = scmp.eq.s32.totalorder %s11, 1
      %p75 = por %p73, %p74
      %p76 = scmp.ne.s32.totalorder %s68, %s71
      %p77 = scmp.eq.s32.totalorder %s11, 0
      %p78 = por %p76, %p77
      %p79 = scmp.ne.s32.totalorder %s68, %s71
      %p80 = scmp.eq.s32.totalorder %s16, 1
      %p81 = por %p79, %p80
      %p82 = scmp.ne.s32.totalorder %s71, %s72
      %p83 = scmp.eq.s32.totalorder %s16, 0
      %p84 = por %p82, %p83
      %p85 = scmp.ne.s32.totalorder %s71, %s72
      %p86 = scmp.eq.s32.totalorder %s17, 1
      %p87 = por %p85, %p86
      %p89 = scmp.ne.s32.totalorder %s72, %s88
      %p90 = scmp.eq.s32.totalorder %s17, 0
      %p91 = por %p89, %p90
      %p92 = scmp.le.s32.totalorder 1, %s11
      %p93 = scmp.lt.s32.totalorder %s11, 3
      %p94 = pnand %p92, %p93
      %p95 = pneg %p94
      // Predicated region
      $region9: #{tpu_custom_call.1} parent=5 // pred_check
        _
      $region10: #{tpu_custom_call.1} parent=5 // pred_check_branch
        %97 = sbr.rel (%p94) target = $region12
      $region11: #{tpu_custom_call.1} parent=5 // pred_region
        %s98 = ssub.s32 %s11, 1
        // Predicated region
        $region13: #{tpu_custom_call.1} parent=11 // pred_check
          %p99 = pneg %p58
        $region14: #{tpu_custom_call.1} parent=11 // pred_check_branch
          %101 = sbr.rel (%p99) target = $region16
        $region15: #{tpu_custom_call.1} parent=11 // pred_region
          _
        $region16: #{tpu_custom_call.1} parent=11 // pred_fallthru
          _
      $region12: #{tpu_custom_call.1} parent=5 // pred_fallthru
        _
      %p102 = scmp.lt.s32.totalorder %s11, 2
      // Predicated region
      $region17: #{tpu_custom_call.1} parent=5 // pred_check
        %p103 = pneg %p102
      $region18: #{tpu_custom_call.1} parent=5 // pred_check_branch
        %105 = sbr.rel (%p103) target = $region20
      $region19: #{tpu_custom_call.1} parent=5 // pred_region
        // Predicated region
        $region21: #{tpu_custom_call.1} parent=19 // pred_check
          %p106 = pneg %p31
        $region22: #{tpu_custom_call.1} parent=19 // pred_check_branch
          %108 = sbr.rel (%p106) target = $region24
        $region23: #{tpu_custom_call.1} parent=19 // pred_region
          %s109 = smul.u32 16, %s11
          %p110 = scmp.lt.s32.totalorder %s109, 31
          %s111 = scalar_select %p110, %s109, 31
          %s112 = smul.addr %s111, 8
          %s113 = scalar_lea.vmem %s0, %s112
          %s114 = smul.u32 16, %s11
        $region24: #{tpu_custom_call.1} parent=19 // pred_fallthru
          _
      $region20: #{tpu_custom_call.1} parent=5 // pred_fallthru
        _
      %p115 = scmp.le.s32.totalorder 1, %s11
      %p116 = scmp.lt.s32.totalorder %s11, 3
      %p117 = pnand %p115, %p116
      %p118 = pneg %p117
      // Predicated region
      $region25: #{tpu_custom_call.1} parent=5 // pred_check
        _
      $region26: #{tpu_custom_call.1} parent=5 // pred_check_branch
        %120 = sbr.rel (%p117) target = $region28
      $region27: #{tpu_custom_call.1} parent=5 // pred_region
        %s121 = ssub.s32 %s11, 1
        %s122 = smul.u32 16, %s16
        %p123 = scmp.lt.s32.totalorder %s122, 31
        %s124 = scalar_select %p123, %s122, 31
        %s125 = smul.addr %s124, 8
        %s126 = scalar_lea.vmem %s0, %s125
        %p127 = pneg %p37
        %p128 = pneg %p34
        %p129 = pneg %p58
        %p130 = pneg %p55
        %p131 = pneg %p84
        %p132 = pneg %p81
        %s133 = sand.u32 %s71, 1
        %s134 = scalar_lea.sflag [#allocation3], %s133
        %s135 = sand.u32 %s71, 1
        %s136 = smul.addr %s135, 256
        %s137 = scalar_lea.vmem [#allocation2], %s136
        %s138 = smul.u32 16, %s16
        %p139 = scmp.lt.s32.totalorder %s138, 31
        %s140 = scalar_select %p139, %s138, 31
        %s141 = smul.addr %s140, 8
        %s142 = scalar_lea.vmem %s0, %s141
        %s143 = smul.u32 16, %s16
        %s144 = smul.u32 16, %s16
        %v145 = vld [vmem:[%s142] sm:$0xff]
        %v146 = vld [vmem:[%s142 + $0x8] sm:$0xff]
        %v147 = vld [vmem:[%s142 + $0x10] sm:$0xff]
        %v148 = vld [vmem:[%s142 + $0x18] sm:$0xff]
        %v149 = vld [vmem:[%s142 + $0x20] sm:$0xff]
        %v150 = vld [vmem:[%s142 + $0x28] sm:$0xff]
        %v151 = vld [vmem:[%s142 + $0x30] sm:$0xff]
        %v152 = vld [vmem:[%s142 + $0x38] sm:$0xff]
        %v153 = vld [vmem:[%s142 + $0x40] sm:$0xff]
        %v154 = vld [vmem:[%s142 + $0x48] sm:$0xff]
        %v155 = vld [vmem:[%s142 + $0x50] sm:$0xff]
        %v156 = vld [vmem:[%s142 + $0x58] sm:$0xff]
        %v157 = vld [vmem:[%s142 + $0x60] sm:$0xff]
        %v158 = vld [vmem:[%s142 + $0x68] sm:$0xff]
        %v159 = vld [vmem:[%s142 + $0x70] sm:$0xff]
        %v160 = vld [vmem:[%s142 + $0x78] sm:$0xff]
        %v161 = vld [vmem:[%s1] sm:$0xff]
        %v162 = vld [vmem:[%s1 + $0x8] sm:$0xff]
        %v163 = vld [vmem:[%s1 + $0x10] sm:$0xff]
        %v164 = vld [vmem:[%s1 + $0x18] sm:$0xff]
        %v165 = vld [vmem:[%s1 + $0x20] sm:$0xff]
        %v166 = vld [vmem:[%s1 + $0x28] sm:$0xff]
        %v167 = vld [vmem:[%s1 + $0x30] sm:$0xff]
        %v168 = vld [vmem:[%s1 + $0x38] sm:$0xff]
        %v169 = vld [vmem:[%s1 + $0x40] sm:$0xff]
        %v170 = vld [vmem:[%s1 + $0x48] sm:$0xff]
        %v171 = vld [vmem:[%s1 + $0x50] sm:$0xff]
        %v172 = vld [vmem:[%s1 + $0x58] sm:$0xff]
        %v173 = vld [vmem:[%s1 + $0x60] sm:$0xff]
        %v174 = vld [vmem:[%s1 + $0x68] sm:$0xff]
        %v175 = vld [vmem:[%s1 + $0x70] sm:$0xff]
        %v176 = vld [vmem:[%s1 + $0x78] sm:$0xff]
        %v177 = vld [vmem:[%s1 + $0x80] sm:$0xff]
        %v178 = vld [vmem:[%s1 + $0x88] sm:$0xff]
        %v179 = vld [vmem:[%s1 + $0x90] sm:$0xff]
        %v180 = vld [vmem:[%s1 + $0x98] sm:$0xff]
        %v181 = vld [vmem:[%s1 + $0xa0] sm:$0xff]
        %v182 = vld [vmem:[%s1 + $0xa8] sm:$0xff]
        %v183 = vld [vmem:[%s1 + $0xb0] sm:$0xff]
        %v184 = vld [vmem:[%s1 + $0xb8] sm:$0xff]
        %v185 = vld [vmem:[%s1 + $0xc0] sm:$0xff]
        %v186 = vld [vmem:[%s1 + $0xc8] sm:$0xff]
        %v187 = vld [vmem:[%s1 + $0xd0] sm:$0xff]
        %v188 = vld [vmem:[%s1 + $0xd8] sm:$0xff]
        %v189 = vld [vmem:[%s1 + $0xe0] sm:$0xff]
        %v190 = vld [vmem:[%s1 + $0xe8] sm:$0xff]
        %v191 = vld [vmem:[%s1 + $0xf0] sm:$0xff]
        %v192 = vld [vmem:[%s1 + $0xf8] sm:$0xff]
        %vm193 = vcmask 523264
        %v195 = vsel %vm193, %v145, 0
        %v198 = vsel %vm193, %v146, 0
        %v201 = vsel %vm193, %v147, 0
        %v204 = vsel %vm193, %v148, 0
        %v207 = vsel %vm193, %v149, 0
        %v210 = vsel %vm193, %v150, 0
        %v213 = vsel %vm193, %v151, 0
        %v216 = vsel %vm193, %v152, 0
        %v219 = vsel %vm193, %v153, 0
        %v222 = vsel %vm193, %v154, 0
        %v225 = vsel %vm193, %v155, 0
        %v228 = vsel %vm193, %v156, 0
        %v231 = vsel %vm193, %v157, 0
        %v234 = vsel %vm193, %v158, 0
        %v237 = vsel %vm193, %v159, 0
        %v240 = vsel %vm193, %v160, 0
        %v243 = vsel %vm193, %v161, 0
        %v246 = vsel %vm193, %v162, 0
        %v249 = vsel %vm193, %v163, 0
        %v252 = vsel %vm193, %v164, 0
        %v255 = vsel %vm193, %v165, 0
        %v258 = vsel %vm193, %v166, 0
        %v261 = vsel %vm193, %v167, 0
        %v264 = vsel %vm193, %v168, 0
        %v267 = vsel %vm193, %v169, 0
        %v270 = vsel %vm193, %v170, 0
        %v273 = vsel %vm193, %v171, 0
        %v276 = vsel %vm193, %v172, 0
        %v279 = vsel %vm193, %v173, 0
        %v282 = vsel %vm193, %v174, 0
        %v285 = vsel %vm193, %v175, 0
        %v288 = vsel %vm193, %v176, 0
        %v291 = vsel %vm193, %v177, 0
        %v294 = vsel %vm193, %v178, 0
        %v297 = vsel %vm193, %v179, 0
        %v300 = vsel %vm193, %v180, 0
        %v303 = vsel %vm193, %v181, 0
        %v306 = vsel %vm193, %v182, 0
        %v309 = vsel %vm193, %v183, 0
        %v312 = vsel %vm193, %v184, 0
        %v315 = vsel %vm193, %v185, 0
        %v318 = vsel %vm193, %v186, 0
        %v321 = vsel %vm193, %v187, 0
        %v324 = vsel %vm193, %v188, 0
        %v327 = vsel %vm193, %v189, 0
        %v330 = vsel %vm193, %v190, 0
        %v333 = vsel %vm193, %v191, 0
        %v336 = vsel %vm193, %v192, 0
        %338 = vmatprep.subr.mxu0 0.0
        %339 = vmatpush1.xpose.msra.mxu0 %v243
        %340 = vmatprep.subr.mxu0 0.0
        %341 = vmatpush1.xpose.msra.mxu0 %v246
        %342 = vmatprep.subr.mxu0 0.0
        %343 = vmatpush1.xpose.msra.mxu0 %v249
        %344 = vmatprep.subr.mxu0 0.0
        %345 = vmatpush1.xpose.msra.mxu0 %v252
        %346 = vmatprep.subr.mxu0 0.0
        %347 = vmatpush1.xpose.msra.mxu0 %v255
        %348 = vmatprep.subr.mxu0 0.0
        %349 = vmatpush1.xpose.msra.mxu0 %v258
        %350 = vmatprep.subr.mxu0 0.0
        %351 = vmatpush1.xpose.msra.mxu0 %v261
        %352 = vmatprep.subr.mxu0 0.0
        %353 = vmatpush1.xpose.msra.mxu0 %v264
        %354 = vmatprep.subr.mxu0 0.0
        %355 = vmatpush1.xpose.msra.mxu0 %v267
        %356 = vmatprep.subr.mxu0 0.0
        %357 = vmatpush1.xpose.msra.mxu0 %v270
        %358 = vmatprep.subr.mxu0 0.0
        %359 = vmatpush1.xpose.msra.mxu0 %v273
        %360 = vmatprep.subr.mxu0 0.0
        %361 = vmatpush1.xpose.msra.mxu0 %v276
        %362 = vmatprep.subr.mxu0 0.0
        %363 = vmatpush1.xpose.msra.mxu0 %v279
        %364 = vmatprep.subr.mxu0 0.0
        %365 = vmatpush1.xpose.msra.mxu0 %v282
        %366 = vmatprep.subr.mxu0 0.0
        %367 = vmatpush1.xpose.msra.mxu0 %v285
        %368 = vmatprep.subr.mxu0 0.0
        %369 = vmatpush1.xpose.msra.mxu0 %v288
        %370 = vmatprep.subr.mxu0 0.0
        %371 = vmatpush1.xpose.msra.mxu0 %v291
        %372 = vmatprep.subr.mxu0 0.0
        %373 = vmatpush1.xpose.msra.mxu0 %v294
        %374 = vmatprep.subr.mxu0 0.0
        %375 = vmatpush1.xpose.msra.mxu0 %v297
        %376 = vmatprep.subr.mxu0 0.0
        %377 = vmatpush1.xpose.msra.mxu0 %v300
        %378 = vmatprep.subr.mxu0 0.0
        %379 = vmatpush1.xpose.msra.mxu0 %v303
        %380 = vmatprep.subr.mxu0 0.0
        %381 = vmatpush1.xpose.msra.mxu0 %v306
        %382 = vmatprep.subr.mxu0 0.0
        %383 = vmatpush1.xpose.msra.mxu0 %v309
        %384 = vmatprep.subr.mxu0 0.0
        %385 = vmatpush1.xpose.msra.mxu0 %v312
        %386 = vmatprep.subr.mxu0 0.0
        %387 = vmatpush1.xpose.msra.mxu0 %v315
        %388 = vmatprep.subr.mxu0 0.0
        %389 = vmatpush1.xpose.msra.mxu0 %v318
        %390 = vmatprep.subr.mxu0 0.0
        %391 = vmatpush1.xpose.msra.mxu0 %v321
        %392 = vmatprep.subr.mxu0 0.0
        %393 = vmatpush1.xpose.msra.mxu0 %v324
        %394 = vmatprep.subr.mxu0 0.0
        %395 = vmatpush1.xpose.msra.mxu0 %v327
        %396 = vmatprep.subr.mxu0 0.0
        %397 = vmatpush1.xpose.msra.mxu0 %v330
        %398 = vmatprep.subr.mxu0 0.0
        %399 = vmatpush1.xpose.msra.mxu0 %v333
        %400 = vmatprep.subr.mxu0 0.0
        %401 = vmatpush1.xpose.msra.mxu0 %v336
        %402 = vmatprep.mubr.f32.mxu0 0.0
        %403 = vmatmul.mubr.f32.gmra.mrb[0].mxu0 %v195
        %v404 = vpop.f32.mrb[0].mxu0
        %v405 = vadd.f32 0.0, %v404
        %v406 = vpop.f32.mrb[0].mxu0
        %v407 = vadd.f32 0.0, %v406
        %408 = vmatprep.mubr.f32.mxu0 0.0
        %409 = vmatmul.mubr.f32.gmra.mrb[0].mxu0 %v198
        %v410 = vpop.f32.mrb[0].mxu0
        %v411 = vadd.f32 0.0, %v410
        %v412 = vpop.f32.mrb[0].mxu0
        %v413 = vadd.f32 0.0, %v412
        %414 = vmatprep.mubr.f32.mxu0 0.0
        %415 = vmatmul.mubr.f32.gmra.mrb[0].mxu0 %v201
        %v416 = vpop.f32.mrb[0].mxu0
        %v417 = vadd.f32 0.0, %v416
        %v418 = vpop.f32.mrb[0].mxu0
        %v419 = vadd.f32 0.0, %v418
        %420 = vmatprep.mubr.f32.mxu0 0.0
        %421 = vmatmul.mubr.f32.gmra.mrb[0].mxu0 %v204
        %v422 = vpop.f32.mrb[0].mxu0
        %v423 = vadd.f32 0.0, %v422
        %v424 = vpop.f32.mrb[0].mxu0
        %v425 = vadd.f32 0.0, %v424
        %426 = vmatprep.mubr.f32.mxu0 0.0
        %427 = vmatmul.mubr.f32.gmra.mrb[0].mxu0 %v207
        %v428 = vpop.f32.mrb[0].mxu0
        %v429 = vadd.f32 0.0, %v428
        %v430 = vpop.f32.mrb[0].mxu0
        %v431 = vadd.f32 0.0, %v430
        %432 = vmatprep.mubr.f32.mxu0 0.0
        %433 = vmatmul.mubr.f32.gmra.mrb[0].mxu0 %v210
        %v434 = vpop.f32.mrb[0].mxu0
        %v435 = vadd.f32 0.0, %v434
        %v436 = vpop.f32.mrb[0].mxu0
        %v437 = vadd.f32 0.0, %v436
        %438 = vmatprep.mubr.f32.mxu0 0.0
        %439 = vmatmul.mubr.f32.gmra.mrb[0].mxu0 %v213
        %v440 = vpop.f32.mrb[0].mxu0
        %v441 = vadd.f32 0.0, %v440
        %v442 = vpop.f32.mrb[0].mxu0
        %v443 = vadd.f32 0.0, %v442
        %444 = vmatprep.mubr.f32.mxu0 0.0
        %445 = vmatmul.mubr.f32.gmra.mrb[0].mxu0 %v216
        %v446 = vpop.f32.mrb[0].mxu0
        %v447 = vadd.f32 0.0, %v446
        %v448 = vpop.f32.mrb[0].mxu0
        %v449 = vadd.f32 0.0, %v448
        %450 = vmatprep.mubr.f32.mxu0 0.0
        %451 = vmatmul.mubr.f32.gmra.mrb[0].mxu0 %v219
        %v452 = vpop.f32.mrb[0].mxu0
        %v453 = vadd.f32 0.0, %v452
        %v454 = vpop.f32.mrb[0].mxu0
        %v455 = vadd.f32 0.0, %v454
        %456 = vmatprep.mubr.f32.mxu0 0.0
        %457 = vmatmul.mubr.f32.gmra.mrb[0].mxu0 %v222
        %v458 = vpop.f32.mrb[0].mxu0
        %v459 = vadd.f32 0.0, %v458
        %v460 = vpop.f32.mrb[0].mxu0
        %v461 = vadd.f32 0.0, %v460
        %462 = vmatprep.mubr.f32.mxu0 0.0
        %463 = vmatmul.mubr.f32.gmra.mrb[0].mxu0 %v225
        %v464 = vpop.f32.mrb[0].mxu0
        %v465 = vadd.f32 0.0, %v464
        %v466 = vpop.f32.mrb[0].mxu0
        %v467 = vadd.f32 0.0, %v466
        %468 = vmatprep.mubr.f32.mxu0 0.0
        %469 = vmatmul.mubr.f32.gmra.mrb[0].mxu0 %v228
        %v470 = vpop.f32.mrb[0].mxu0
        %v471 = vadd.f32 0.0, %v470
        %v472 = vpop.f32.mrb[0].mxu0
        %v473 = vadd.f32 0.0, %v472
        %474 = vmatprep.mubr.f32.mxu0 0.0
        %475 = vmatmul.mubr.f32.gmra.mrb[0].mxu0 %v231
        %v476 = vpop.f32.mrb[0].mxu0
        %v477 = vadd.f32 0.0, %v476
        %v478 = vpop.f32.mrb[0].mxu0
        %v479 = vadd.f32 0.0, %v478
        %480 = vmatprep.mubr.f32.mxu0 0.0
        %481 = vmatmul.mubr.f32.gmra.mrb[0].mxu0 %v234
        %v482 = vpop.f32.mrb[0].mxu0
        %v483 = vadd.f32 0.0, %v482
        %v484 = vpop.f32.mrb[0].mxu0
        %v485 = vadd.f32 0.0, %v484
        %486 = vmatprep.mubr.f32.mxu0 0.0
        %487 = vmatmul.mubr.f32.gmra.mrb[0].mxu0 %v237
        %v488 = vpop.f32.mrb[0].mxu0
        %v489 = vadd.f32 0.0, %v488
        %v490 = vpop.f32.mrb[0].mxu0
        %v491 = vadd.f32 0.0, %v490
        %492 = vmatprep.mubr.f32.mxu0 0.0
        %493 = vmatmul.mubr.f32.gmra.mrb[0].mxu0 %v240
        %v494 = vpop.f32.mrb[0].mxu0
        %v495 = vadd.f32 0.0, %v494
        %v496 = vpop.f32.mrb[0].mxu0
        %v497 = vadd.f32 0.0, %v496
        %498 = vdwg.mxu0
        %v499 = vmul.f32 %v405, 0.5
        %v500 = vmul.f32 %v407, 0.5
        %v501 = vmul.f32 %v411, 0.5
        %v502 = vmul.f32 %v413, 0.5
        %v503 = vmul.f32 %v417, 0.5
        %v504 = vmul.f32 %v419, 0.5
        %v505 = vmul.f32 %v423, 0.5
        %v506 = vmul.f32 %v425, 0.5
        %v507 = vmul.f32 %v429, 0.5
        %v508 = vmul.f32 %v431, 0.5
        %v509 = vmul.f32 %v435, 0.5
        %v510 = vmul.f32 %v437, 0.5
        %v511 = vmul.f32 %v441, 0.5
        %v512 = vmul.f32 %v443, 0.5
        %v513 = vmul.f32 %v447, 0.5
        %v514 = vmul.f32 %v449, 0.5
        %v515 = vmul.f32 %v453, 0.5
        %v516 = vmul.f32 %v455, 0.5
        %v517 = vmul.f32 %v459, 0.5
        %v518 = vmul.f32 %v461, 0.5
        %v519 = vmul.f32 %v465, 0.5
        %v520 = vmul.f32 %v467, 0.5
        %v521 = vmul.f32 %v471, 0.5
        %v522 = vmul.f32 %v473, 0.5
        %v523 = vmul.f32 %v477, 0.5
        %v524 = vmul.f32 %v479, 0.5
        %v525 = vmul.f32 %v483, 0.5
        %v526 = vmul.f32 %v485, 0.5
        %v527 = vmul.f32 %v489, 0.5
        %v528 = vmul.f32 %v491, 0.5
        %v529 = vmul.f32 %v495, 0.5
        %v530 = vmul.f32 %v497, 0.5
        %v531 = vtanh.pop %v499
        %v532 = vtanh.pop %v500
        %v533 = vtanh.pop %v501
        %v534 = vtanh.pop %v502
        %v535 = vtanh.pop %v503
        %v536 = vtanh.pop %v504
        %v537 = vtanh.pop %v505
        %v538 = vtanh.pop %v506
        %v539 = vtanh.pop %v507
        %v540 = vtanh.pop %v508
        %v541 = vtanh.pop %v509
        %v542 = vtanh.pop %v510
        %v543 = vtanh.pop %v511
        %v544 = vtanh.pop %v512
        %v545 = vtanh.pop %v513
        %v546 = vtanh.pop %v514
        %v547 = vtanh.pop %v515
        %v548 = vtanh.pop %v516
        %v549 = vtanh.pop %v517
        %v550 = vtanh.pop %v518
        %v551 = vtanh.pop %v519
        %v552 = vtanh.pop %v520
        %v553 = vtanh.pop %v521
        %v554 = vtanh.pop %v522
        %v555 = vtanh.pop %v523
        %v556 = vtanh.pop %v524
        %v557 = vtanh.pop %v525
        %v558 = vtanh.pop %v526
        %v559 = vtanh.pop %v527
        %v560 = vtanh.pop %v528
        %v561 = vtanh.pop %v529
        %v562 = vtanh.pop %v530
        %v563 = vadd.f32 %v531, 1.0
        %v564 = vadd.f32 %v532, 1.0
        %v565 = vadd.f32 %v533, 1.0
        %v566 = vadd.f32 %v534, 1.0
        %v567 = vadd.f32 %v535, 1.0
        %v568 = vadd.f32 %v536, 1.0
        %v569 = vadd.f32 %v537, 1.0
        %v570 = vadd.f32 %v538, 1.0
        %v571 = vadd.f32 %v539, 1.0
        %v572 = vadd.f32 %v540, 1.0
        %v573 = vadd.f32 %v541, 1.0
        %v574 = vadd.f32 %v542, 1.0
        %v575 = vadd.f32 %v543, 1.0
        %v576 = vadd.f32 %v544, 1.0
        %v577 = vadd.f32 %v545, 1.0
        %v578 = vadd.f32 %v546, 1.0
        %v579 = vadd.f32 %v547, 1.0
        %v580 = vadd.f32 %v548, 1.0
        %v581 = vadd.f32 %v549, 1.0
        %v582 = vadd.f32 %v550, 1.0
        %v583 = vadd.f32 %v551, 1.0
        %v584 = vadd.f32 %v552, 1.0
        %v585 = vadd.f32 %v553, 1.0
        %v586 = vadd.f32 %v554, 1.0
        %v587 = vadd.f32 %v555, 1.0
        %v588 = vadd.f32 %v556, 1.0
        %v589 = vadd.f32 %v557, 1.0
        %v590 = vadd.f32 %v558, 1.0
        %v591 = vadd.f32 %v559, 1.0
        %v592 = vadd.f32 %v560, 1.0
        %v593 = vadd.f32 %v561, 1.0
        %v594 = vadd.f32 %v562, 1.0
        %v595 = vmul.f32 %v563, 0.5
        %v596 = vmul.f32 %v564, 0.5
        %v597 = vmul.f32 %v565, 0.5
        %v598 = vmul.f32 %v566, 0.5
        %v599 = vmul.f32 %v567, 0.5
        %v600 = vmul.f32 %v568, 0.5
        %v601 = vmul.f32 %v569, 0.5
        %v602 = vmul.f32 %v570, 0.5
        %v603 = vmul.f32 %v571, 0.5
        %v604 = vmul.f32 %v572, 0.5
        %v605 = vmul.f32 %v573, 0.5
        %v606 = vmul.f32 %v574, 0.5
        %v607 = vmul.f32 %v575, 0.5
        %v608 = vmul.f32 %v576, 0.5
        %v609 = vmul.f32 %v577, 0.5
        %v610 = vmul.f32 %v578, 0.5
        %v611 = vmul.f32 %v579, 0.5
        %v612 = vmul.f32 %v580, 0.5
        %v613 = vmul.f32 %v581, 0.5
        %v614 = vmul.f32 %v582, 0.5
        %v615 = vmul.f32 %v583, 0.5
        %v616 = vmul.f32 %v584, 0.5
        %v617 = vmul.f32 %v585, 0.5
        %v618 = vmul.f32 %v586, 0.5
        %v619 = vmul.f32 %v587, 0.5
        %v620 = vmul.f32 %v588, 0.5
        %v621 = vmul.f32 %v589, 0.5
        %v622 = vmul.f32 %v590, 0.5
        %v623 = vmul.f32 %v591, 0.5
        %v624 = vmul.f32 %v592, 0.5
        %v625 = vmul.f32 %v593, 0.5
        %v626 = vmul.f32 %v594, 0.5
        %627 = vst [vmem:[%s137] sm:$0xff] %v595
        %628 = vst [vmem:[%s137 + $0x8] sm:$0xff] %v596
        %629 = vst [vmem:[%s137 + $0x10] sm:$0xff] %v597
        %630 = vst [vmem:[%s137 + $0x18] sm:$0xff] %v598
        %631 = vst [vmem:[%s137 + $0x20] sm:$0xff] %v599
        %632 = vst [vmem:[%s137 + $0x28] sm:$0xff] %v600
        %633 = vst [vmem:[%s137 + $0x30] sm:$0xff] %v601
        %634 = vst [vmem:[%s137 + $0x38] sm:$0xff] %v602
        %635 = vst [vmem:[%s137 + $0x40] sm:$0xff] %v603
        %636 = vst [vmem:[%s137 + $0x48] sm:$0xff] %v604
        %637 = vst [vmem:[%s137 + $0x50] sm:$0xff] %v605
        %638 = vst [vmem:[%s137 + $0x58] sm:$0xff] %v606
        %639 = vst [vmem:[%s137 + $0x60] sm:$0xff] %v607
        %640 = vst [vmem:[%s137 + $0x68] sm:$0xff] %v608
        %641 = vst [vmem:[%s137 + $0x70] sm:$0xff] %v609
        %642 = vst [vmem:[%s137 + $0x78] sm:$0xff] %v610
        %643 = vst [vmem:[%s137 + $0x80] sm:$0xff] %v611
        %644 = vst [vmem:[%s137 + $0x88] sm:$0xff] %v612
        %645 = vst [vmem:[%s137 + $0x90] sm:$0xff] %v613
        %646 = vst [vmem:[%s137 + $0x98] sm:$0xff] %v614
        %647 = vst [vmem:[%s137 + $0xa0] sm:$0xff] %v615
        %648 = vst [vmem:[%s137 + $0xa8] sm:$0xff] %v616
        %649 = vst [vmem:[%s137 + $0xb0] sm:$0xff] %v617
        %650 = vst [vmem:[%s137 + $0xb8] sm:$0xff] %v618
        %651 = vst [vmem:[%s137 + $0xc0] sm:$0xff] %v619
        %652 = vst [vmem:[%s137 + $0xc8] sm:$0xff] %v620
        %653 = vst [vmem:[%s137 + $0xd0] sm:$0xff] %v621
        %654 = vst [vmem:[%s137 + $0xd8] sm:$0xff] %v622
        %655 = vst [vmem:[%s137 + $0xe0] sm:$0xff] %v623
        %656 = vst [vmem:[%s137 + $0xe8] sm:$0xff] %v624
        %657 = vst [vmem:[%s137 + $0xf0] sm:$0xff] %v625
        %658 = vst [vmem:[%s137 + $0xf8] sm:$0xff] %v626
        %s659 = sand.u32 %s71, 1
        %s660 = scalar_lea.sflag [#allocation3], %s659
        %s661 = sand.u32 %s71, 1
        %s662 = smul.addr %s661, 256
        %s663 = scalar_lea.vmem [#allocation2], %s662
        // Predicated region
        $region29: #{tpu_custom_call.1} parent=27 // pred_check
          %p664 = pneg %p81
        $region30: #{tpu_custom_call.1} parent=27 // pred_check_branch
          %666 = sbr.rel (%p664) target = $region32
        $region31: #{tpu_custom_call.1} parent=27 // pred_region
          %s667 = smul.u32 16, %s16
          %s669 = ssub.s32 4096, 4096
          %670 = vsyncadd %s660, %s669
          %s671 = smul.addr %s667, 2
          %s672 = smul.addr %s671, 128
          %s673 = scalar_lea.hbm %s2, %s672
          %s674 = sshll.u32 %s663, 4
          %s675 = int_to_ptr.vmem [resolvable:$true] %s674
          %680 = dma.vmem_to_hbm [thread:$0]  %s675, 4096, %s673, %s660, 256, 256, 16
        $region32: #{tpu_custom_call.1} parent=27 // pred_fallthru
          _
      $region28: #{tpu_custom_call.1} parent=5 // pred_fallthru
        _
      %p681 = scmp.le.s32.totalorder 2, %s11
      // Predicated region
      $region33: #{tpu_custom_call.1} parent=5 // pred_check
        %p682 = pneg %p681
      $region34: #{tpu_custom_call.1} parent=5 // pred_check_branch
        %684 = sbr.rel (%p682) target = $region36
      $region35: #{tpu_custom_call.1} parent=5 // pred_region
        %s685 = ssub.s32 %s11, 2
        // Predicated region
        $region37: #{tpu_custom_call.1} parent=35 // pred_check
          %p686 = pneg %p87
        $region38: #{tpu_custom_call.1} parent=35 // pred_check_branch
          %688 = sbr.rel (%p686) target = $region40
        $region39: #{tpu_custom_call.1} parent=35 // pred_region
          %s689 = sand.u32 %s72, 1
          %s690 = scalar_lea.sflag [#allocation3], %s689
          %s691 = sand.u32 %s72, 1
          %s692 = smul.addr %s691, 256
          %s693 = scalar_lea.vmem [#allocation2], %s692
          %694 = dma.done %s690, 4096
        $region40: #{tpu_custom_call.1} parent=35 // pred_fallthru
          _
      $region36: #{tpu_custom_call.1} parent=5 // pred_fallthru
        _
    $region6: #{tpu_custom_call.1} parent=1 // loop_footer
      %s15 = sadd.s32 1, %s11
    $region7: #{tpu_custom_call.1} parent=1 // loop_footer_branch
      %10 = sbr.rel target = $region3
    $region8: #{tpu_custom_call.1} parent=1 // loop_exit
      _
    %695 = vsyncpa [#allocation3], 1
    %s696 = scalar_lea.sflag [#allocation3], 1
    %697 = vsyncpa %s696, 1

</llo_original>
